<compile_context>
chip_gen: v7x
topology: tpu7x:2x2x1
jax: 0.10.0
libtpu: 0.0.40
codegen_flags: <defaults>
</compile_context>

<pallas_src>
import functools

import jax
import jax.numpy as jnp
from jax import lax
from jax.experimental import pallas as pl
from jax.experimental.pallas import tpu as pltpu


# ----------------------------- tile accumulation -----------------------------

def _accum_tile(x_ref, sum_sc, max_sc, *, n_valid, block_w, acc_w):
    """Accumulate sum/max of the first `n_valid` lanes of x_ref (C, block_w)
    into the lane-wide (C, acc_w) scratch accumulators. All sizes static."""
    n_full = n_valid // acc_w
    r = n_valid - n_full * acc_w

    if n_full > 0:
        @pl.loop(0, n_full, unroll=n_full <= 4)
        def _chunks(i):
            off = pl.multiple_of(i * acc_w, acc_w)
            c = x_ref[:, pl.ds(off, acc_w)].astype(jnp.float32)     # (C, acc_w)
            sum_sc[...] += c
            max_sc[...] = jnp.maximum(max_sc[...], c)

    if r > 0:
        off = n_full * acc_w                       # static
        load_w = min(acc_w, block_w - off)          # lanes present in the block
        c = x_ref[:, pl.ds(off, load_w)].astype(jnp.float32)        # (C, load_w)
        if r < load_w:
            # Boundary block: lanes >= r are garbage from the OOB HBM region.
            lane = lax.broadcasted_iota(jnp.int32, c.shape, 1)
            valid = lane < r
            csum = jnp.where(valid, c, 0.0)
            cmax = jnp.where(valid, c, -jnp.inf)
        else:
            csum = c
            cmax = c
        sum_sc[:, :load_w] += csum
        max_sc[:, :load_w] = jnp.maximum(max_sc[:, :load_w], cmax)


# ----------------------------- Pallas kernel --------------------------------

def _cam_kernel(x_ref, w1_ref, w2_ref, out_ref, sum_sc, max_sc,
                *, inv_hw, hw, thw, acc_w):
    """Grid = (B, HW_tiles). x block: (C, tHW); out block: (C, 1)."""
    k = pl.program_id(1)

    @pl.when(k == 0)
    def _init():
        sum_sc[...] = jnp.zeros_like(sum_sc)
        max_sc[...] = jnp.full_like(max_sc, -jnp.inf)

    nk = -(-hw // thw)                 # static cdiv
    rem = hw - (nk - 1) * thw          # valid elements in last tile (1..thw)

    if rem == thw:                     # all tiles full -> no masking anywhere
        _accum_tile(x_ref, sum_sc, max_sc, n_valid=thw, block_w=thw, acc_w=acc_w)
    else:
        @pl.when(k < nk - 1)
        def _full_tiles():
            _accum_tile(x_ref, sum_sc, max_sc, n_valid=thw, block_w=thw,
                        acc_w=acc_w)

        @pl.when(k == nk - 1)
        def _tail_tile():
            _accum_tile(x_ref, sum_sc, max_sc, n_valid=rem, block_w=thw,
                        acc_w=acc_w)

    @pl.when(k == nk - 1)
    def _finalize():
        w1 = w1_ref[...].astype(jnp.float32)                        # (Cr, C)
        w2 = w2_ref[...].astype(jnp.float32)                        # (C, Cr)
        # Single cross-lane reduce per batch element (masked lanes are 0 / -inf).
        avg = jnp.sum(sum_sc[...], axis=-1, keepdims=True) * inv_hw   # (C, 1)
        mx = jnp.max(max_sc[...], axis=-1, keepdims=True)             # (C, 1)
        # Batch avg & max as the two columns of one (C, 2) RHS (no concat needed).
        col = lax.broadcasted_iota(jnp.int32, (avg.shape[0], 2), 1)
        p = jnp.where(col == 0, avg, mx)                               # (C, 2)
        h = jnp.maximum(
            jnp.dot(w1, p, preferred_element_type=jnp.float32), 0.0)  # (Cr, 2)
        hsum = jnp.sum(h, axis=-1, keepdims=True)                      # (Cr, 1)
        o = jnp.dot(w2, hsum, preferred_element_type=jnp.float32)      # (C, 1)
        out_ref[...] = jax.nn.sigmoid(o).astype(out_ref.dtype)


# ------------------------------ JAX wrapper ----------------------------------

def _pick_acc_w(c, *, cap_bytes=256 * 1024):
    """Lane width of the VPU accumulators; keep C*acc_w*4 modest for large C."""
    w = (cap_bytes // max(c * 4, 1)) // 128 * 128
    return int(max(128, min(512, w)))


def _pick_hw_tile(hw, c, itemsize, budget_bytes, acc_w):
    """Largest multiple of acc_w such that C*tHW*itemsize <= budget; if the whole
    HW extent fits the budget, use it directly (full-extent block, always legal)."""
    lanes = budget_bytes // max(c * itemsize, 1)
    thw = max((lanes // acc_w) * acc_w, acc_w)
    if thw >= hw:
        return int(hw)
    return int(thw)


def channel_attention_forward(x_nchw, w1, w2, *, x_block_budget_bytes=4 * 2**20):
    """x: (B, C, H, W). w1: (C//ratio, C), w2: (C, C//ratio). Returns (B, C, 1, 1)."""
    B, C, H, W = x_nchw.shape
    Cr = w1.shape[0]
    HW = H * W
    x = x_nchw.reshape(B, C, HW)          # free reshape, NCHW-native in HBM

    itemsize = x.dtype.itemsize
    acc_w = _pick_acc_w(C)
    tHW = _pick_hw_tile(HW, C, itemsize, x_block_budget_bytes, acc_w)
    nk = pl.cdiv(HW, tHW)
    inv_hw = 1.0 / float(HW)

    tile_bytes = C * tHW * itemsize
    vmem_limit = int(max(32 * 2**20, min(48 * 2**20, 4 * tile_bytes)))

    kernel = functools.partial(_cam_kernel, inv_hw=inv_hw, hw=HW, thw=tHW,
                               acc_w=acc_w)

    out = pl.pallas_call(
        kernel,
        out_shape=jax.ShapeDtypeStruct((B, C, 1), x.dtype),
        grid_spec=pltpu.PrefetchScalarGridSpec(
            num_scalar_prefetch=0,
            grid=(B, nk),
            in_specs=[
                pl.BlockSpec((None, C, tHW), lambda b, k: (b, 0, k)),  # x tile
                pl.BlockSpec((Cr, C), lambda b, k: (0, 0)),            # MLP w1
                pl.BlockSpec((C, Cr), lambda b, k: (0, 0)),            # MLP w2
            ],
            out_specs=pl.BlockSpec((None, C, 1), lambda b, k: (b, 0, 0)),
            scratch_shapes=[pltpu.VMEM((C, acc_w), jnp.float32),       # running sum
                            pltpu.VMEM((C, acc_w), jnp.float32)],      # running max
        ),
        compiler_params=pltpu.CompilerParams(
            dimension_semantics=("parallel", "arbitrary"),
            vmem_limit_bytes=vmem_limit),
    )(x, w1, w2)

    return out.reshape(B, C, 1, 1)


# ------------------------------ pure-JAX ref ----------------------------------

def cam_reference(x, w1, w2):
    avg = jnp.mean(x, axis=(2, 3))                                # (B, C)
    mx = jnp.max(x, axis=(2, 3))                                  # (B, C)

    def mlp(v):                                                   # (B, C) -> (B, C)
        h = jnp.maximum(v @ w1.T, 0.0)                            # (B, Cr)
        return h @ w2.T                                           # (B, C)

    B, C = avg.shape
    return jax.nn.sigmoid(mlp(avg) + mlp(mx)).reshape(B, C, 1, 1)


# ----------------------------------- main -------------------------------------

if __name__ == "__main__":
    key = jax.random.PRNGKey(0)

    def run_case(B, C, H, W, ratio, budget):
        Cr = max(C // ratio, 1)
        kx, k1, k2 = jax.random.split(jax.random.fold_in(key, H * 1000 + W), 3)
        x = jax.random.normal(kx, (B, C, H, W), dtype=jnp.float32)
        # Conv2d(C,Cr,1,bias=False).weight -> (Cr,C); Conv2d(Cr,C,1,bias=False).weight -> (C,Cr)
        w1 = 0.1 * jax.random.normal(k1, (Cr, C), dtype=jnp.float32)
        w2 = 0.1 * jax.random.normal(k2, (C, Cr), dtype=jnp.float32)
        y = jax.block_until_ready(
            channel_attention_forward(x, w1, w2, x_block_budget_bytes=budget))
        y_ref = jax.block_until_ready(cam_reference(x, w1, w2))
        assert y.shape == (B, C, 1, 1), y.shape
        assert jnp.allclose(y, y_ref, atol=1e-5, rtol=1e-5), \
            float(jnp.max(jnp.abs(y - y_ref)))

    # Primary small case: HW=256 fits one full-extent tile (default budget path).
    run_case(2, 32, 16, 16, 16, 4 * 2**20)
    # Small budget forces tiling: HW=1024 -> 2 tiles of 512 (exact division path).
    run_case(2, 32, 32, 32, 16, 64 * 1024)
    # HW=900 -> tiles 512 + 388: exercises the cdiv grid + masked tail path.
    run_case(2, 32, 30, 30, 16, 64 * 1024)

    print("KERNEL_OK")
</pallas_src>

<mosaic_0001>
module attributes {stable_mosaic.version = 11 : i64} {
  func.func @_cam_kernel(%arg0: i32, %arg1: i32, %arg2: memref<1x32x256xf32, #tpu.memory_space<vmem>>, %arg3: memref<2x32xf32, #tpu.memory_space<vmem>>, %arg4: memref<32x2xf32, #tpu.memory_space<vmem>>, %arg5: memref<1x32x1xf32, #tpu.memory_space<vmem>>, %arg6: memref<32x512xf32, #tpu.memory_space<vmem>>, %arg7: memref<32x512xf32, #tpu.memory_space<vmem>>) attributes {dimension_semantics = [#tpu.dimension_semantics<parallel>, #tpu.dimension_semantics<arbitrary>], iteration_bounds = array<i64: 2, 1>, scalar_prefetch = 0 : i64, scratch_operands = 2 : i64, tpu.core_type = #tpu.core_type<tc>, window_params = [{transform_indices = @transform_0, window_bounds = array<i64: 1, 32, 256>}, {pipeline_mode = #tpu.pipeline_mode<synchronous>, transform_indices = @transform_1, window_bounds = array<i64: 2, 32>}, {pipeline_mode = #tpu.pipeline_mode<synchronous>, transform_indices = @transform_2, window_bounds = array<i64: 32, 2>}, {transform_indices = @transform_3, window_bounds = array<i64: 1, 32, 1>}]} {
    %c0_i32 = arith.constant 0 : i32
    %0 = arith.cmpi eq, %arg1, %c0_i32 : i32
    %1 = arith.extui %0 : i1 to i32
    %c0_i32_0 = arith.constant 0 : i32
    %2 = arith.cmpi ne, %1, %c0_i32_0 : i32
    scf.if %2 {
      %cst = arith.constant 0.000000e+00 : f32
      %14 = vector.broadcast %cst : f32 to vector<32x512xf32>
      %c0_13 = arith.constant 0 : index
      %c0_14 = arith.constant 0 : index
      %15 = vector.load %arg6[%c0_13, %c0_14] : memref<32x512xf32, #tpu.memory_space<vmem>>, vector<32x512xf32>
      tpu.vector_store %arg6[%c0_13, %c0_14], %14 {strides = array<i32>} : memref<32x512xf32, #tpu.memory_space<vmem>>, vector<32x512xf32>,
      %cst_15 = arith.constant 0xFF800000 : f32
      %16 = vector.broadcast %cst_15 : f32 to vector<32x512xf32>
      %c0_16 = arith.constant 0 : index
      %c0_17 = arith.constant 0 : index
      %17 = vector.load %arg7[%c0_16, %c0_17] : memref<32x512xf32, #tpu.memory_space<vmem>>, vector<32x512xf32>
      tpu.vector_store %arg7[%c0_16, %c0_17], %16 {strides = array<i32>} : memref<32x512xf32, #tpu.memory_space<vmem>>, vector<32x512xf32>,
    } else {
    }
    %c0 = arith.constant 0 : index
    %c0_1 = arith.constant 0 : index
    %c0_2 = arith.constant 0 : index
    %3 = vector.load %arg2[%c0, %c0_1, %c0_2] : memref<1x32x256xf32, #tpu.memory_space<vmem>>, vector<1x32x256xf32>
    %4 = vector.shape_cast %3 : vector<1x32x256xf32> to vector<32x256xf32>
    %c0_3 = arith.constant 0 : index
    %c0_4 = arith.constant 0 : index
    %5 = vector.load %arg6[%c0_3, %c0_4] : memref<32x512xf32, #tpu.memory_space<vmem>>, vector<32x256xf32>
    %6 = arith.addf %5, %4 : vector<32x256xf32>
    %c0_5 = arith.constant 0 : index
    %c0_6 = arith.constant 0 : index
    %7 = vector.load %arg6[%c0_5, %c0_6] : memref<32x512xf32, #tpu.memory_space<vmem>>, vector<32x256xf32>
    tpu.vector_store %arg6[%c0_5, %c0_6], %6 {strides = array<i32>} : memref<32x512xf32, #tpu.memory_space<vmem>>, vector<32x256xf32>,
    %c0_7 = arith.constant 0 : index
    %c0_8 = arith.constant 0 : index
    %8 = vector.load %arg7[%c0_7, %c0_8] : memref<32x512xf32, #tpu.memory_space<vmem>>, vector<32x256xf32>
    %9 = arith.maximumf %8, %4 : vector<32x256xf32>
    %c0_9 = arith.constant 0 : index
    %c0_10 = arith.constant 0 : index
    %10 = vector.load %arg7[%c0_9, %c0_10] : memref<32x512xf32, #tpu.memory_space<vmem>>, vector<32x256xf32>
    tpu.vector_store %arg7[%c0_9, %c0_10], %9 {strides = array<i32>} : memref<32x512xf32, #tpu.memory_space<vmem>>, vector<32x256xf32>,
    %c0_i32_11 = arith.constant 0 : i32
    %11 = arith.cmpi eq, %arg1, %c0_i32_11 : i32
    %12 = arith.extui %11 : i1 to i32
    %c0_i32_12 = arith.constant 0 : i32
    %13 = arith.cmpi ne, %12, %c0_i32_12 : i32
    scf.if %13 {
      %c0_13 = arith.constant 0 : index
      %c0_14 = arith.constant 0 : index
      %14 = vector.load %arg3[%c0_13, %c0_14] : memref<2x32xf32, #tpu.memory_space<vmem>>, vector<2x32xf32>
      %c0_15 = arith.constant 0 : index
      %c0_16 = arith.constant 0 : index
      %15 = vector.load %arg4[%c0_15, %c0_16] : memref<32x2xf32, #tpu.memory_space<vmem>>, vector<32x2xf32>
      %c0_17 = arith.constant 0 : index
      %c0_18 = arith.constant 0 : index
      %16 = vector.load %arg6[%c0_17, %c0_18] : memref<32x512xf32, #tpu.memory_space<vmem>>, vector<32x512xf32>
      %cst = arith.constant dense<0.000000e+00> : vector<32xf32>
      %17 = vector.multi_reduction <add>, %16, %cst [1] : vector<32x512xf32> to vector<32xf32>
      %18 = vector.shape_cast %17 : vector<32xf32> to vector<32x1xf32>
      %cst_19 = arith.constant 3.906250e-03 : f32
      %19 = vector.broadcast %cst_19 : f32 to vector<32x1xf32>
      %20 = arith.mulf %18, %19 : vector<32x1xf32>
      %c0_20 = arith.constant 0 : index
      %c0_21 = arith.constant 0 : index
      %21 = vector.load %arg7[%c0_20, %c0_21] : memref<32x512xf32, #tpu.memory_space<vmem>>, vector<32x512xf32>
      %cst_22 = arith.constant dense<0xFF800000> : vector<32xf32>
      %22 = vector.multi_reduction <maximumf>, %21, %cst_22 [1] : vector<32x512xf32> to vector<32xf32>
      %23 = vector.shape_cast %22 : vector<32xf32> to vector<32x1xf32>
      %24 = tpu.iota {dimensions = array<i32: 1>} : vector<32x2xi32>
      %c0_i32_23 = arith.constant 0 : i32
      %25 = vector.broadcast %c0_i32_23 : i32 to vector<32x2xi32>
      %26 = arith.cmpi eq, %24, %25 : vector<32x2xi32>
      %27 = vector.shape_cast %20 : vector<32x1xf32> to vector<32x1xf32>
      %28 = vector.broadcast %27 : vector<32x1xf32> to vector<32x2xf32>
      %29 = vector.shape_cast %23 : vector<32x1xf32> to vector<32x1xf32>
      %30 = vector.broadcast %29 : vector<32x1xf32> to vector<32x2xf32>
      %31 = arith.select %26, %28, %30 : vector<32x2xi1>, vector<32x2xf32>
      %cst_24 = arith.constant dense<0.000000e+00> : vector<2x2xf32>
      %32 = tpu.matmul %14, %31, %cst_24 {dimension_numbers = #tpu.dot_dimension_numbers<[1], [0], [0], [1], [0, 0, 1, 1], [], []>} : vector<2x32xf32>, vector<32x2xf32>, vector<2x2xf32> -> vector<2x2xf32>
      %cst_25 = arith.constant 0.000000e+00 : f32
      %33 = vector.broadcast %cst_25 : f32 to vector<2x2xf32>
      %34 = arith.maximumf %32, %33 : vector<2x2xf32>
      %cst_26 = arith.constant dense<0.000000e+00> : vector<2xf32>
      %35 = vector.multi_reduction <add>, %34, %cst_26 [1] : vector<2x2xf32> to vector<2xf32>
      %36 = vector.shape_cast %35 : vector<2xf32> to vector<2x1xf32>
      %cst_27 = arith.constant dense<0.000000e+00> : vector<32x1xf32>
      %37 = tpu.matmul %15, %36, %cst_27 {dimension_numbers = #tpu.dot_dimension_numbers<[1], [0], [0], [1], [0, 0, 1, 1], [], []>} : vector<32x2xf32>, vector<2x1xf32>, vector<32x1xf32> -> vector<32x1xf32>
      %38 = arith.negf %37 : vector<32x1xf32>
      %39 = math.exp %38 : vector<32x1xf32>
      %cst_28 = arith.constant 1.000000e+00 : f32
      %40 = vector.broadcast %cst_28 : f32 to vector<32x1xf32>
      %41 = arith.addf %40, %39 : vector<32x1xf32>
      %42 = arith.divf %40, %41 : vector<32x1xf32>
      %c0_29 = arith.constant 0 : index
      %c0_30 = arith.constant 0 : index
      %c0_31 = arith.constant 0 : index
      %43 = vector.load %arg5[%c0_29, %c0_30, %c0_31] : memref<1x32x1xf32, #tpu.memory_space<vmem>>, vector<1x32x1xf32>
      %44 = vector.shape_cast %43 : vector<1x32x1xf32> to vector<32x1xf32>
      %45 = vector.shape_cast %42 : vector<32x1xf32> to vector<1x32x1xf32>
      tpu.vector_store %arg5[%c0_29, %c0_30, %c0_31], %45 {strides = array<i32>} : memref<1x32x1xf32, #tpu.memory_space<vmem>>, vector<1x32x1xf32>,
    } else {
    }
    return
  }
  func.func @transform_0(%arg0: i32, %arg1: i32) -> (i32, i32, i32) {
    %c0_i32 = arith.constant 0 : i32
    %c0_i32_0 = arith.constant 0 : i32
    return %arg0, %c0_i32, %arg1 : i32, i32, i32
  }
  func.func @transform_1(%arg0: i32, %arg1: i32) -> (i32, i32) {
    %c0_i32 = arith.constant 0 : i32
    %c0_i32_0 = arith.constant 0 : i32
    %c0_i32_1 = arith.constant 0 : i32
    return %c0_i32, %c0_i32_0 : i32, i32
  }
  func.func @transform_2(%arg0: i32, %arg1: i32) -> (i32, i32) {
    %c0_i32 = arith.constant 0 : i32
    %c0_i32_0 = arith.constant 0 : i32
    %c0_i32_1 = arith.constant 0 : i32
    return %c0_i32, %c0_i32_0 : i32, i32
  }
  func.func @transform_3(%arg0: i32, %arg1: i32) -> (i32, i32, i32) {
    %c0_i32 = arith.constant 0 : i32
    %c0_i32_0 = arith.constant 0 : i32
    %c0_i32_1 = arith.constant 0 : i32
    return %arg0, %c0_i32, %c0_i32_0 : i32, i32, i32
  }
}

</mosaic_0001>

<llo_original>
// kernel: tpu_custom_call.1
$region0: #{tpu_custom_call.1}
  #allocation0 [shape = 'u32[]', space=smem, size = 0x4, offset = 0x4, fixed_abs, tag = 'smem constant byte address 0x4 - core index']
  #allocation1 [shape = 'u32[144,128]{1,0:T(1,128)}', space=vmem, size = 0x12000, scoped, tag = 'internal scratch']
  #allocation2 [shape = 'f32[32,512]{1,0:T(8,128)}', space=vmem, size = 0x10000, scoped, tag = 'scratch operand']
  #allocation3 [shape = 'f32[32,512]{1,0:T(8,128)}', space=vmem, size = 0x10000, scoped, tag = 'scratch operand']
  %s0 = inlined_call_operand.hbm [shape: f32[2,32,256], index: 0, kind: input, shape index: {}]
  %s1 = inlined_call_operand.vmem [shape: f32[2,32], index: 1, kind: input, shape index: {}]
  %s2 = inlined_call_operand.vmem [shape: f32[32,2], index: 2, kind: input, shape index: {}]
  %s3 = inlined_call_operand.vmem [shape: f32[2,32,1], index: 3, kind: output, shape index: {}]
  %s4 = sld [smem:[#allocation0]]
  $region57: #{tpu_custom_call.1} parent=0
    _
  %s6 = ssub.s32 1, %s4
  %s7 = scalar_select 0, %s6, %s4
  $region1: #{tpu_custom_call.1} parent=0
    #allocation4 [shape = 'u8[65536]{0}', space=vmem, size = 0x10000, scoped, tag = 'input window, operand 0']
    #allocation5 [shape = 's32[2]{0}', space=sflag, size = 0x8, scoped, tag = 'scoped memory for tpu_custom_call.1']
    %8 = vsyncpa [#allocation5], 0
    %s9 = scalar_lea.sflag [#allocation5], 1
    %10 = vsyncpa %s9, 0
    loop: start=0, step=1, limit=4
    $region2: #{tpu_custom_call.1} parent=1 // loop_pre_header
      _
    $region3: #{tpu_custom_call.1} parent=1 // loop_header
      %s12 = sphi 0, %s16
      %p13 = scmp.ge.s32.totalorder %s12, 4
      %s19 = sphi 0, %s31
      %s20 = sphi 0, %s27
      %s21 = sphi 0, %s19
      %s22 = sphi 0, %s20
      %s23 = sphi 0, %s21
      %s24 = sphi 0, %s22
      %s36 = sphi 0, %s38
      %s39 = sphi 0, %s36
      %s40 = sphi 0, %s39
      %s56 = sphi 0, %s40
      %s60 = sphi 0, %s60
      %s62 = sphi 0, %s60
      %s63 = sphi 0, %s62
      %s77 = sphi 0, %s63
      %s81 = sphi 0, %s81
      %s83 = sphi 0, %s81
      %s84 = sphi 0, %s83
      %s98 = sphi 0, %s84
      %s104 = sphi 0, %s106
      %s107 = sphi 0, %s104
      %s108 = sphi 0, %s107
      %s124 = sphi 0, %s108
    $region4: #{tpu_custom_call.1} parent=1 // loop_header_branch
      %15 = sbr.rel (%p13) target = $region8
    $region5: #{tpu_custom_call.1} parent=1 // loop_body
      %s17 = ssub.s32 %s12, 1
      %s18 = ssub.s32 %s12, 2
      %s25 = sadd.s32 1, %s20
      %p26 = scmp.ge.s32.totalorder %s25, 1
      %s27 = scalar_select %p26, 0, %s25
      %s28 = sadd.s32 1, %s19
      %s29 = scalar_select %p26, %s28, %s19
      %p30 = scmp.ge.s32.totalorder %s29, 2
      %s31 = scalar_select %p30, 0, %s29
      %s32 = ssub.s32 %s19, %s31
      %s33 = ssub.s32 %s20, %s27
      %s34 = sor.u32 %s32, %s33
      %p35 = scmp.eq.s32.totalorder %s34, 0
      %s37 = sadd.s32 %s36, 1
      %s38 = scalar_select %p35, %s36, %s37
      %p41 = pneg %p35
      %p42 = scmp.eq.s32.totalorder %s12, 1
      %p43 = por %p41, %p42
      %p44 = scmp.ne.s32.totalorder %s36, %s39
      %p45 = scmp.eq.s32.totalorder %s12, 0
      %p46 = por %p44, %p45
      %p47 = scmp.ne.s32.totalorder %s36, %s39
      %p48 = scmp.eq.s32.totalorder %s17, 1
      %p49 = por %p47, %p48
      %p50 = scmp.ne.s32.totalorder %s39, %s40
      %p51 = scmp.eq.s32.totalorder %s17, 0
      %p52 = por %p50, %p51
      %p53 = scmp.ne.s32.totalorder %s39, %s40
      %p54 = scmp.eq.s32.totalorder %s18, 1
      %p55 = por %p53, %p54
      %p57 = scmp.ne.s32.totalorder %s40, %s56
      %p58 = scmp.eq.s32.totalorder %s18, 0
      %p59 = por %p57, %p58
      %s61 = sadd.s32 %s60, 1
      %p64 = scmp.eq.s32.totalorder %s12, 1
      %p65 = scmp.ne.s32.totalorder %s60, %s62
      %p66 = scmp.eq.s32.totalorder %s12, 0
      %p67 = por %p65, %p66
      %p68 = scmp.ne.s32.totalorder %s60, %s62
      %p69 = scmp.eq.s32.totalorder %s17, 1
      %p70 = por %p68, %p69
      %p71 = scmp.ne.s32.totalorder %s62, %s63
      %p72 = scmp.eq.s32.totalorder %s17, 0
      %p73 = por %p71, %p72
      %p74 = scmp.ne.s32.totalorder %s62, %s63
      %p75 = scmp.eq.s32.totalorder %s18, 1
      %p76 = por %p74, %p75
      %p78 = scmp.ne.s32.totalorder %s63, %s77
      %p79 = scmp.eq.s32.totalorder %s18, 0
      %p80 = por %p78, %p79
      %s82 = sadd.s32 %s81, 1
      %p85 = scmp.eq.s32.totalorder %s12, 1
      %p86 = scmp.ne.s32.totalorder %s81, %s83
      %p87 = scmp.eq.s32.totalorder %s12, 0
      %p88 = por %p86, %p87
      %p89 = scmp.ne.s32.totalorder %s81, %s83
      %p90 = scmp.eq.s32.totalorder %s17, 1
      %p91 = por %p89, %p90
      %p92 = scmp.ne.s32.totalorder %s83, %s84
      %p93 = scmp.eq.s32.totalorder %s17, 0
      %p94 = por %p92, %p93
      %p95 = scmp.ne.s32.totalorder %s83, %s84
      %p96 = scmp.eq.s32.totalorder %s18, 1
      %p97 = por %p95, %p96
      %p99 = scmp.ne.s32.totalorder %s84, %s98
      %p100 = scmp.eq.s32.totalorder %s18, 0
      %p101 = por %p99, %p100
      %s102 = ssub.s32 %s19, %s31
      %p103 = scmp.eq.s32.totalorder %s102, 0
      %s105 = sadd.s32 %s104, 1
      %s106 = scalar_select %p103, %s104, %s105
      %p109 = pneg %p103
      %p110 = scmp.eq.s32.totalorder %s12, 1
      %p111 = por %p109, %p110
      %p112 = scmp.ne.s32.totalorder %s104, %s107
      %p113 = scmp.eq.s32.totalorder %s12, 0
      %p114 = por %p112, %p113
      %p115 = scmp.ne.s32.totalorder %s104, %s107
      %p116 = scmp.eq.s32.totalorder %s17, 1
      %p117 = por %p115, %p116
      %p118 = scmp.ne.s32.totalorder %s107, %s108
      %p119 = scmp.eq.s32.totalorder %s17, 0
      %p120 = por %p118, %p119
      %p121 = scmp.ne.s32.totalorder %s107, %s108
      %p122 = scmp.eq.s32.totalorder %s18, 1
      %p123 = por %p121, %p122
      %p125 = scmp.ne.s32.totalorder %s108, %s124
      %p126 = scmp.eq.s32.totalorder %s18, 0
      %p127 = por %p125, %p126
      %p128 = scmp.le.s32.totalorder 1, %s12
      %p129 = scmp.lt.s32.totalorder %s12, 3
      %p130 = pnand %p128, %p129
      %p131 = pneg %p130
      // Predicated region
      $region9: #{tpu_custom_call.1} parent=5 // pred_check
        _
      $region10: #{tpu_custom_call.1} parent=5 // pred_check_branch
        %133 = sbr.rel (%p130) target = $region12
      $region11: #{tpu_custom_call.1} parent=5 // pred_region
        %s134 = ssub.s32 %s12, 1
        // Predicated region
        $region13: #{tpu_custom_call.1} parent=11 // pred_check
          %p135 = pneg %p73
        $region14: #{tpu_custom_call.1} parent=11 // pred_check_branch
          %137 = sbr.rel (%p135) target = $region16
        $region15: #{tpu_custom_call.1} parent=11 // pred_region
          _
        $region16: #{tpu_custom_call.1} parent=11 // pred_fallthru
          _
        // Predicated region
        $region17: #{tpu_custom_call.1} parent=11 // pred_check
          %p138 = pneg %p94
        $region18: #{tpu_custom_call.1} parent=11 // pred_check_branch
          %140 = sbr.rel (%p138) target = $region20
        $region19: #{tpu_custom_call.1} parent=11 // pred_region
          _
        $region20: #{tpu_custom_call.1} parent=11 // pred_fallthru
          _
      $region12: #{tpu_custom_call.1} parent=5 // pred_fallthru
        _
      %p141 = scmp.lt.s32.totalorder %s12, 2
      // Predicated region
      $region21: #{tpu_custom_call.1} parent=5 // pred_check
        %p142 = pneg %p141
      $region22: #{tpu_custom_call.1} parent=5 // pred_check_branch
        %144 = sbr.rel (%p142) target = $region24
      $region23: #{tpu_custom_call.1} parent=5 // pred_region
        // Predicated region
        $region25: #{tpu_custom_call.1} parent=23 // pred_check
          %p145 = pneg %p46
        $region26: #{tpu_custom_call.1} parent=23 // pred_check_branch
          %147 = sbr.rel (%p145) target = $region28
        $region27: #{tpu_custom_call.1} parent=23 // pred_region
          %s148 = sand.u32 %s36, 1
          %s149 = scalar_lea.sflag [#allocation5], %s148
          %s150 = sand.u32 %s36, 1
          %s151 = smul.addr %s150, 64
          %s152 = scalar_lea.vmem [#allocation4], %s151
          %s153 = smul.u32 2, %s20
          %s155 = ssub.s32 1024, 1024
          %156 = vsyncadd %s149, %s155
          %s157 = smul.addr %s19, 8
          %s158 = sadd.s32 %s153, %s157
          %s159 = smul.addr %s158, 128
          %s160 = scalar_lea.hbm %s0, %s159
          %s161 = sshll.u32 %s152, 4
          %s162 = int_to_ptr.vmem [resolvable:$true] %s161
          %167 = dma.hbm_to_vmem [thread:$0]  %s160, 1024, %s162, %s149, 256, 256, 16
        $region28: #{tpu_custom_call.1} parent=23 // pred_fallthru
          _
      $region24: #{tpu_custom_call.1} parent=5 // pred_fallthru
        _
      %p168 = scmp.le.s32.totalorder 1, %s12
      %p169 = scmp.lt.s32.totalorder %s12, 3
      %p170 = pnand %p168, %p169
      %p171 = pneg %p170
      // Predicated region
      $region29: #{tpu_custom_call.1} parent=5 // pred_check
        _
      $region30: #{tpu_custom_call.1} parent=5 // pred_check_branch
        %173 = sbr.rel (%p170) target = $region32
      $region31: #{tpu_custom_call.1} parent=5 // pred_region
        %s174 = ssub.s32 %s12, 1
        %s175 = sand.u32 %s39, 1
        %s176 = scalar_lea.sflag [#allocation5], %s175
        %s177 = sand.u32 %s39, 1
        %s178 = smul.addr %s177, 64
        %s179 = scalar_lea.vmem [#allocation4], %s178
        // Predicated region
        $region33: #{tpu_custom_call.1} parent=31 // pred_check
          %p180 = pneg %p52
        $region34: #{tpu_custom_call.1} parent=31 // pred_check_branch
          %182 = sbr.rel (%p180) target = $region36
        $region35: #{tpu_custom_call.1} parent=31 // pred_region
          %183 = dma.done %s176, 1024
        $region36: #{tpu_custom_call.1} parent=31 // pred_fallthru
          _
        %s184 = sand.u32 %s39, 1
        %s185 = scalar_lea.sflag [#allocation5], %s184
        %s186 = sand.u32 %s39, 1
        %s187 = smul.addr %s186, 64
        %s188 = scalar_lea.vmem [#allocation4], %s187
        %p189 = pneg %p52
        %p190 = pneg %p49
        %p191 = pneg %p73
        %p192 = pneg %p70
        %p193 = pneg %p94
        %p194 = pneg %p91
        %p195 = pneg %p120
        %p196 = pneg %p117
        %p197 = scmp.lt.s32.totalorder %s21, 1
        %s198 = scalar_select %p197, %s21, 1
        %s199 = smul.addr %s198, 4
        %s200 = smul.addr %s199, 8
        %s201 = scalar_lea.vmem %s3, %s200
        %s202 = smul.u32 2, %s22
        %p203 = scmp.lt.s32.totalorder %s21, 1
        %s204 = scalar_select %p203, %s21, 1
        %s205 = smul.addr %s204, 4
        %s206 = smul.addr %s205, 8
        %s207 = scalar_lea.vmem %s3, %s206
        %p208 = scmp.eq.s32.totalorder %s22, 0
        // Predicated region
        $region37: #{tpu_custom_call.1} parent=31 // pred_check
          %p209 = pneg %p208
        $region38: #{tpu_custom_call.1} parent=31 // pred_check_branch
          %211 = sbr.rel (%p209) target = $region40
        $region39: #{tpu_custom_call.1} parent=31 // pred_region
          %212 = vst [vmem:[#allocation2] sm:$0xff] 0.0
          %213 = vst [vmem:[#allocation2 + $0x8] sm:$0xff] 0.0
          %214 = vst [vmem:[#allocation2 + $0x10] sm:$0xff] 0.0
          %215 = vst [vmem:[#allocation2 + $0x18] sm:$0xff] 0.0
          %216 = vst [vmem:[#allocation2 + $0x20] sm:$0xff] 0.0
          %217 = vst [vmem:[#allocation2 + $0x28] sm:$0xff] 0.0
          %218 = vst [vmem:[#allocation2 + $0x30] sm:$0xff] 0.0
          %219 = vst [vmem:[#allocation2 + $0x38] sm:$0xff] 0.0
          %220 = vst [vmem:[#allocation2 + $0x40] sm:$0xff] 0.0
          %221 = vst [vmem:[#allocation2 + $0x48] sm:$0xff] 0.0
          %222 = vst [vmem:[#allocation2 + $0x50] sm:$0xff] 0.0
          %223 = vst [vmem:[#allocation2 + $0x58] sm:$0xff] 0.0
          %224 = vst [vmem:[#allocation2 + $0x60] sm:$0xff] 0.0
          %225 = vst [vmem:[#allocation2 + $0x68] sm:$0xff] 0.0
          %226 = vst [vmem:[#allocation2 + $0x70] sm:$0xff] 0.0
          %227 = vst [vmem:[#allocation2 + $0x78] sm:$0xff] 0.0
          %228 = vst [vmem:[#allocation3] sm:$0xff] -inf
          %229 = vst [vmem:[#allocation3 + $0x8] sm:$0xff] -inf
          %230 = vst [vmem:[#allocation3 + $0x10] sm:$0xff] -inf
          %231 = vst [vmem:[#allocation3 + $0x18] sm:$0xff] -inf
          %232 = vst [vmem:[#allocation3 + $0x20] sm:$0xff] -inf
          %233 = vst [vmem:[#allocation3 + $0x28] sm:$0xff] -inf
          %234 = vst [vmem:[#allocation3 + $0x30] sm:$0xff] -inf
          %235 = vst [vmem:[#allocation3 + $0x38] sm:$0xff] -inf
          %236 = vst [vmem:[#allocation3 + $0x40] sm:$0xff] -inf
          %237 = vst [vmem:[#allocation3 + $0x48] sm:$0xff] -inf
          %238 = vst [vmem:[#allocation3 + $0x50] sm:$0xff] -inf
          %239 = vst [vmem:[#allocation3 + $0x58] sm:$0xff] -inf
          %240 = vst [vmem:[#allocation3 + $0x60] sm:$0xff] -inf
          %241 = vst [vmem:[#allocation3 + $0x68] sm:$0xff] -inf
          %242 = vst [vmem:[#allocation3 + $0x70] sm:$0xff] -inf
          %243 = vst [vmem:[#allocation3 + $0x78] sm:$0xff] -inf
        $region40: #{tpu_custom_call.1} parent=31 // pred_fallthru
          _
        %v244 = vld [vmem:[%s179] sm:$0xff]
        %v245 = vld [vmem:[%s179 + $0x8] sm:$0xff]
        %v246 = vld [vmem:[%s179 + $0x10] sm:$0xff]
        %v247 = vld [vmem:[%s179 + $0x18] sm:$0xff]
        %v248 = vld [vmem:[%s179 + $0x20] sm:$0xff]
        %v249 = vld [vmem:[%s179 + $0x28] sm:$0xff]
        %v250 = vld [vmem:[%s179 + $0x30] sm:$0xff]
        %v251 = vld [vmem:[%s179 + $0x38] sm:$0xff]
        %v252 = vld [vmem:[#allocation2] sm:$0xff]
        %v253 = vld [vmem:[#allocation2 + $0x8] sm:$0xff]
        %v254 = vld [vmem:[#allocation2 + $0x20] sm:$0xff]
        %v255 = vld [vmem:[#allocation2 + $0x28] sm:$0xff]
        %v256 = vld [vmem:[#allocation2 + $0x40] sm:$0xff]
        %v257 = vld [vmem:[#allocation2 + $0x48] sm:$0xff]
        %v258 = vld [vmem:[#allocation2 + $0x60] sm:$0xff]
        %v259 = vld [vmem:[#allocation2 + $0x68] sm:$0xff]
        %v260 = vadd.f32 %v252, %v244
        %v261 = vadd.f32 %v253, %v245
        %v262 = vadd.f32 %v254, %v246
        %v263 = vadd.f32 %v255, %v247
        %v264 = vadd.f32 %v256, %v248
        %v265 = vadd.f32 %v257, %v249
        %v266 = vadd.f32 %v258, %v250
        %v267 = vadd.f32 %v259, %v251
        %268 = vst [vmem:[#allocation2] sm:$0xff] %v260
        %269 = vst [vmem:[#allocation2 + $0x8] sm:$0xff] %v261
        %270 = vst [vmem:[#allocation2 + $0x20] sm:$0xff] %v262
        %271 = vst [vmem:[#allocation2 + $0x28] sm:$0xff] %v263
        %272 = vst [vmem:[#allocation2 + $0x40] sm:$0xff] %v264
        %273 = vst [vmem:[#allocation2 + $0x48] sm:$0xff] %v265
        %274 = vst [vmem:[#allocation2 + $0x60] sm:$0xff] %v266
        %275 = vst [vmem:[#allocation2 + $0x68] sm:$0xff] %v267
        %v276 = vld [vmem:[#allocation3] sm:$0xff]
        %v277 = vld [vmem:[#allocation3 + $0x8] sm:$0xff]
        %v278 = vld [vmem:[#allocation3 + $0x20] sm:$0xff]
        %v279 = vld [vmem:[#allocation3 + $0x28] sm:$0xff]
        %v280 = vld [vmem:[#allocation3 + $0x40] sm:$0xff]
        %v281 = vld [vmem:[#allocation3 + $0x48] sm:$0xff]
        %v282 = vld [vmem:[#allocation3 + $0x60] sm:$0xff]
        %v283 = vld [vmem:[#allocation3 + $0x68] sm:$0xff]
        %v284 = vmax.f32 %v276, %v244
        %v285 = vmax.f32 %v277, %v245
        %v286 = vmax.f32 %v278, %v246
        %v287 = vmax.f32 %v279, %v247
        %v288 = vmax.f32 %v280, %v248
        %v289 = vmax.f32 %v281, %v249
        %v290 = vmax.f32 %v282, %v250
        %v291 = vmax.f32 %v283, %v251
        %292 = vst [vmem:[#allocation3] sm:$0xff] %v284
        %293 = vst [vmem:[#allocation3 + $0x8] sm:$0xff] %v285
        %294 = vst [vmem:[#allocation3 + $0x20] sm:$0xff] %v286
        %295 = vst [vmem:[#allocation3 + $0x28] sm:$0xff] %v287
        %296 = vst [vmem:[#allocation3 + $0x40] sm:$0xff] %v288
        %297 = vst [vmem:[#allocation3 + $0x48] sm:$0xff] %v289
        %298 = vst [vmem:[#allocation3 + $0x60] sm:$0xff] %v290
        %299 = vst [vmem:[#allocation3 + $0x68] sm:$0xff] %v291
        // Predicated region
        $region41: #{tpu_custom_call.1} parent=31 // pred_check
          %p300 = pneg %p208
        $region42: #{tpu_custom_call.1} parent=31 // pred_check_branch
          %302 = sbr.rel (%p300) target = $region44
        $region43: #{tpu_custom_call.1} parent=31 // pred_region
          %v303 = vld [vmem:[%s1] sm:$0x3]
          %v304 = vld [vmem:[%s2] sm:$0xff]
          %v305 = vld [vmem:[%s2 + $0x8] sm:$0xff]
          %v306 = vld [vmem:[%s2 + $0x10] sm:$0xff]
          %v307 = vld [vmem:[%s2 + $0x18] sm:$0xff]
          %v308 = vld [vmem:[#allocation2] sm:$0xff]
          %v309 = vld [vmem:[#allocation2 + $0x8] sm:$0xff]
          %v310 = vld [vmem:[#allocation2 + $0x10] sm:$0xff]
          %v311 = vld [vmem:[#allocation2 + $0x18] sm:$0xff]
          %v312 = vld [vmem:[#allocation2 + $0x20] sm:$0xff]
          %v313 = vld [vmem:[#allocation2 + $0x28] sm:$0xff]
          %v314 = vld [vmem:[#allocation2 + $0x30] sm:$0xff]
          %v315 = vld [vmem:[#allocation2 + $0x38] sm:$0xff]
          %v316 = vld [vmem:[#allocation2 + $0x40] sm:$0xff]
          %v317 = vld [vmem:[#allocation2 + $0x48] sm:$0xff]
          %v318 = vld [vmem:[#allocation2 + $0x50] sm:$0xff]
          %v319 = vld [vmem:[#allocation2 + $0x58] sm:$0xff]
          %v320 = vld [vmem:[#allocation2 + $0x60] sm:$0xff]
          %v321 = vld [vmem:[#allocation2 + $0x68] sm:$0xff]
          %v322 = vld [vmem:[#allocation2 + $0x70] sm:$0xff]
          %v323 = vld [vmem:[#allocation2 + $0x78] sm:$0xff]
          %v324 = vadd.f32 %v308, %v309
          %v325 = vadd.f32 %v324, %v310
          %v326 = vadd.f32 %v325, %v311
          %327 = vadd.xlane.f32.xlu0 %v326
          %v328 = vpop.xlane.xlu0 %327
          %v329 = vadd.f32 %v312, %v313
          %v330 = vadd.f32 %v329, %v314
          %v331 = vadd.f32 %v330, %v315
          %332 = vadd.xlane.f32.xlu0 %v331
          %v333 = vpop.xlane.xlu0 %332
          %v334 = vadd.f32 %v316, %v317
          %v335 = vadd.f32 %v334, %v318
          %v336 = vadd.f32 %v335, %v319
          %337 = vadd.xlane.f32.xlu0 %v336
          %v338 = vpop.xlane.xlu0 %337
          %v339 = vadd.f32 %v320, %v321
          %v340 = vadd.f32 %v339, %v322
          %v341 = vadd.f32 %v340, %v323
          %342 = vadd.xlane.f32.xlu0 %v341
          %v343 = vpop.xlane.xlu0 %342
          %v344 = vmul.f32 %v328, 0.00390625
          %v345 = vmul.f32 %v333, 0.00390625
          %v346 = vmul.f32 %v338, 0.00390625
          %v347 = vmul.f32 %v343, 0.00390625
          %v348 = vld [vmem:[#allocation3] sm:$0xff]
          %v349 = vld [vmem:[#allocation3 + $0x8] sm:$0xff]
          %v350 = vld [vmem:[#allocation3 + $0x10] sm:$0xff]
          %v351 = vld [vmem:[#allocation3 + $0x18] sm:$0xff]
          %v352 = vld [vmem:[#allocation3 + $0x20] sm:$0xff]
          %v353 = vld [vmem:[#allocation3 + $0x28] sm:$0xff]
          %v354 = vld [vmem:[#allocation3 + $0x30] sm:$0xff]
          %v355 = vld [vmem:[#allocation3 + $0x38] sm:$0xff]
          %v356 = vld [vmem:[#allocation3 + $0x40] sm:$0xff]
          %v357 = vld [vmem:[#allocation3 + $0x48] sm:$0xff]
          %v358 = vld [vmem:[#allocation3 + $0x50] sm:$0xff]
          %v359 = vld [vmem:[#allocation3 + $0x58] sm:$0xff]
          %v360 = vld [vmem:[#allocation3 + $0x60] sm:$0xff]
          %v361 = vld [vmem:[#allocation3 + $0x68] sm:$0xff]
          %v362 = vld [vmem:[#allocation3 + $0x70] sm:$0xff]
          %v363 = vld [vmem:[#allocation3 + $0x78] sm:$0xff]
          %v364 = vmax.f32 %v348, %v349
          %v365 = vmax.f32 %v364, %v350
          %v366 = vmax.f32 %v365, %v351
          %367 = vmax.xlane.f32.xlu0 %v366
          %v368 = vpop.xlane.xlu0 %367
          %v369 = vmax.f32 %v352, %v353
          %v370 = vmax.f32 %v369, %v354
          %v371 = vmax.f32 %v370, %v355
          %372 = vmax.xlane.f32.xlu0 %v371
          %v373 = vpop.xlane.xlu0 %372
          %v374 = vmax.f32 %v356, %v357
          %v375 = vmax.f32 %v374, %v358
          %v376 = vmax.f32 %v375, %v359
          %377 = vmax.xlane.f32.xlu0 %v376
          %v378 = vpop.xlane.xlu0 %377
          %v379 = vmax.f32 %v360, %v361
          %v380 = vmax.f32 %v379, %v362
          %v381 = vmax.f32 %v380, %v363
          %382 = vmax.xlane.f32.xlu0 %v381
          %v383 = vpop.xlane.xlu0 %382
          %v384 = vlaneseq
          %v385 = vand.u32 %v384, 127
          %vm386 = vcmp.eq.s32.totalorder %v385, 0
          %v387 = vsel %vm386, %v344, %v368
          %v388 = vsel %vm386, %v345, %v373
          %v389 = vsel %vm386, %v346, %v378
          %v390 = vsel %vm386, %v347, %v383
          %vm391 = vcmask 261120
          %v393 = vsel %vm391, %v303, 0
          %395 = vmatprep.subr.mxu0 0.0
          %396 = vmatpush1.msra.mxu0 %v387
          %397 = vmatprep.subr.mxu0 0.0
          %398 = vmatpush1.msra.mxu0 %v388
          %399 = vmatprep.subr.mxu0 0.0
          %400 = vmatpush1.msra.mxu0 %v389
          %401 = vmatprep.subr.mxu0 0.0
          %402 = vmatpush1.msra.mxu0 %v390
          %403 = vmatprep.subr.mxu0 0.0
          %404 = vmatpush1.msra.mxu0 0.0
          %405 = vmatprep.subr.mxu0 0.0
          %406 = vmatpush1.msra.mxu0 0.0
          %407 = vmatprep.subr.mxu0 0.0
          %408 = vmatpush1.msra.mxu0 0.0
          %409 = vmatprep.subr.mxu0 0.0
          %410 = vmatpush1.msra.mxu0 0.0
          %411 = vmatprep.subr.mxu0 0.0
          %412 = vmatpush1.msra.mxu0 0.0
          %413 = vmatprep.subr.mxu0 0.0
          %414 = vmatpush1.msra.mxu0 0.0
          %415 = vmatprep.subr.mxu0 0.0
          %416 = vmatpush1.msra.mxu0 0.0
          %417 = vmatprep.subr.mxu0 0.0
          %418 = vmatpush1.msra.mxu0 0.0
          %419 = vmatprep.subr.mxu0 0.0
          %420 = vmatpush1.msra.mxu0 0.0
          %421 = vmatprep.subr.mxu0 0.0
          %422 = vmatpush1.msra.mxu0 0.0
          %423 = vmatprep.subr.mxu0 0.0
          %424 = vmatpush1.msra.mxu0 0.0
          %425 = vmatprep.subr.mxu0 0.0
          %426 = vmatpush1.msra.mxu0 0.0
          %427 = vmatprep.subr.mxu0 0.0
          %428 = vmatpush1.msra.mxu0 0.0
          %429 = vmatprep.subr.mxu0 0.0
          %430 = vmatpush1.msra.mxu0 0.0
          %431 = vmatprep.subr.mxu0 0.0
          %432 = vmatpush1.msra.mxu0 0.0
          %433 = vmatprep.subr.mxu0 0.0
          %434 = vmatpush1.msra.mxu0 0.0
          %435 = vmatprep.subr.mxu0 0.0
          %436 = vmatpush1.msra.mxu0 0.0
          %437 = vmatprep.subr.mxu0 0.0
          %438 = vmatpush1.msra.mxu0 0.0
          %439 = vmatprep.subr.mxu0 0.0
          %440 = vmatpush1.msra.mxu0 0.0
          %441 = vmatprep.subr.mxu0 0.0
          %442 = vmatpush1.msra.mxu0 0.0
          %443 = vmatprep.subr.mxu0 0.0
          %444 = vmatpush1.msra.mxu0 0.0
          %445 = vmatprep.subr.mxu0 0.0
          %446 = vmatpush1.msra.mxu0 0.0
          %447 = vmatprep.subr.mxu0 0.0
          %448 = vmatpush1.msra.mxu0 0.0
          %449 = vmatprep.subr.mxu0 0.0
          %450 = vmatpush1.msra.mxu0 0.0
          %451 = vmatprep.subr.mxu0 0.0
          %452 = vmatpush1.msra.mxu0 0.0
          %453 = vmatprep.subr.mxu0 0.0
          %454 = vmatpush1.msra.mxu0 0.0
          %455 = vmatprep.subr.mxu0 0.0
          %456 = vmatpush1.msra.mxu0 0.0
          %457 = vmatprep.subr.mxu0 0.0
          %458 = vmatpush1.msra.mxu0 0.0
          %459 = vmatprep.mubr.f32.mxu0 0.0
          %460 = vmatmul.mubr.f32.gmra.mrb[0].mxu0 %v393
          %v461 = vpop.f32.mrb[0].mxu0
          %v462 = vadd.f32 0.0, %v461
          %v463 = vpop.f32.mrb[0].mxu0
          %464 = vdwg.mxu0
          %v465 = vmax.f32 %v462, 0.0
          %vm466 = vcmask 9216
          %v467 = vsel %vm466, %v465, 0.0
          %468 = vadd.xlane.f32.xlu0 %v467
          %v469 = vpop.xlane.xlu0 %468
          %vm470 = vcmask 15360
          %v472 = vsel %vm470, %v304, 0
          %v475 = vsel %vm470, %v305, 0
          %v478 = vsel %vm470, %v306, 0
          %v481 = vsel %vm470, %v307, 0
          %vm483 = vcmask 1041408
          %v485 = vsel %vm483, %v469, 0
          %487 = vmatprep.subr.mxu0 0.0
          %488 = vmatpush1.msra.mxu0 %v485
          %489 = vmatprep.subr.mxu0 0.0
          %490 = vmatpush1.msra.mxu0 0.0
          %491 = vmatprep.subr.mxu0 0.0
          %492 = vmatpush1.msra.mxu0 0.0
          %493 = vmatprep.subr.mxu0 0.0
          %494 = vmatpush1.msra.mxu0 0.0
          %495 = vmatprep.subr.mxu0 0.0
          %496 = vmatpush1.msra.mxu0 0.0
          %497 = vmatprep.subr.mxu0 0.0
          %498 = vmatpush1.msra.mxu0 0.0
          %499 = vmatprep.subr.mxu0 0.0
          %500 = vmatpush1.msra.mxu0 0.0
          %501 = vmatprep.subr.mxu0 0.0
          %502 = vmatpush1.msra.mxu0 0.0
          %503 = vmatprep.subr.mxu0 0.0
          %504 = vmatpush1.msra.mxu0 0.0
          %505 = vmatprep.subr.mxu0 0.0
          %506 = vmatpush1.msra.mxu0 0.0
          %507 = vmatprep.subr.mxu0 0.0
          %508 = vmatpush1.msra.mxu0 0.0
          %509 = vmatprep.subr.mxu0 0.0
          %510 = vmatpush1.msra.mxu0 0.0
          %511 = vmatprep.subr.mxu0 0.0
          %512 = vmatpush1.msra.mxu0 0.0
          %513 = vmatprep.subr.mxu0 0.0
          %514 = vmatpush1.msra.mxu0 0.0
          %515 = vmatprep.subr.mxu0 0.0
          %516 = vmatpush1.msra.mxu0 0.0
          %517 = vmatprep.subr.mxu0 0.0
          %518 = vmatpush1.msra.mxu0 0.0
          %519 = vmatprep.subr.mxu0 0.0
          %520 = vmatpush1.msra.mxu0 0.0
          %521 = vmatprep.subr.mxu0 0.0
          %522 = vmatpush1.msra.mxu0 0.0
          %523 = vmatprep.subr.mxu0 0.0
          %524 = vmatpush1.msra.mxu0 0.0
          %525 = vmatprep.subr.mxu0 0.0
          %526 = vmatpush1.msra.mxu0 0.0
          %527 = vmatprep.subr.mxu0 0.0
          %528 = vmatpush1.msra.mxu0 0.0
          %529 = vmatprep.subr.mxu0 0.0
          %530 = vmatpush1.msra.mxu0 0.0
          %531 = vmatprep.subr.mxu0 0.0
          %532 = vmatpush1.msra.mxu0 0.0
          %533 = vmatprep.subr.mxu0 0.0
          %534 = vmatpush1.msra.mxu0 0.0
          %535 = vmatprep.subr.mxu0 0.0
          %536 = vmatpush1.msra.mxu0 0.0
          %537 = vmatprep.subr.mxu0 0.0
          %538 = vmatpush1.msra.mxu0 0.0
          %539 = vmatprep.subr.mxu0 0.0
          %540 = vmatpush1.msra.mxu0 0.0
          %541 = vmatprep.subr.mxu0 0.0
          %542 = vmatpush1.msra.mxu0 0.0
          %543 = vmatprep.subr.mxu0 0.0
          %544 = vmatpush1.msra.mxu0 0.0
          %545 = vmatprep.subr.mxu0 0.0
          %546 = vmatpush1.msra.mxu0 0.0
          %547 = vmatprep.subr.mxu0 0.0
          %548 = vmatpush1.msra.mxu0 0.0
          %549 = vmatprep.subr.mxu0 0.0
          %550 = vmatpush1.msra.mxu0 0.0
          %551 = vmatprep.mubr.f32.mxu0 0.0
          %552 = vmatmul.mubr.f32.gmra.mrb[0].mxu0 %v472
          %v553 = vpop.f32.mrb[0].mxu0
          %v554 = vadd.f32 0.0, %v553
          %v555 = vpop.f32.mrb[0].mxu0
          %556 = vmatprep.mubr.f32.mxu0 0.0
          %557 = vmatmul.mubr.f32.gmra.mrb[0].mxu0 %v475
          %v558 = vpop.f32.mrb[0].mxu0
          %v559 = vadd.f32 0.0, %v558
          %v560 = vpop.f32.mrb[0].mxu0
          %561 = vmatprep.mubr.f32.mxu0 0.0
          %562 = vmatmul.mubr.f32.gmra.mrb[0].mxu0 %v478
          %v563 = vpop.f32.mrb[0].mxu0
          %v564 = vadd.f32 0.0, %v563
          %v565 = vpop.f32.mrb[0].mxu0
          %566 = vmatprep.mubr.f32.mxu0 0.0
          %567 = vmatmul.mubr.f32.gmra.mrb[0].mxu0 %v481
          %v568 = vpop.f32.mrb[0].mxu0
          %v569 = vadd.f32 0.0, %v568
          %v570 = vpop.f32.mrb[0].mxu0
          %571 = vdwg.mxu0
          %v572 = vxor.u32 %v554, 2147483648
          %v573 = vxor.u32 %v559, 2147483648
          %v574 = vxor.u32 %v564, 2147483648
          %v575 = vxor.u32 %v569, 2147483648
          %v576 = vmul.f32 %v572, 1.442695
          %v577 = vpow.pop %v576
          %v578 = vmul.f32 %v573, 1.442695
          %v579 = vpow.pop %v578
          %v580 = vmul.f32 %v574, 1.442695
          %v581 = vpow.pop %v580
          %v582 = vmul.f32 %v575, 1.442695
          %v583 = vpow.pop %v582
          %v584 = vadd.f32 %v577, 1.0
          %v585 = vadd.f32 %v579, 1.0
          %v586 = vadd.f32 %v581, 1.0
          %v587 = vadd.f32 %v583, 1.0
          %v588 = vrcp.pop %v584
          %v589 = vmul.f32 1.0, %v588
          %v590 = vrcp.pop %v585
          %v591 = vmul.f32 1.0, %v590
          %v592 = vrcp.pop %v586
          %v593 = vmul.f32 1.0, %v592
          %v594 = vrcp.pop %v587
          %v595 = vmul.f32 1.0, %v594
          %vm596 = vcmask 7168
          %597 = vst.msk [vmem:[%s207] sm:$0xff] %vm596, %v589
          %598 = vst.msk [vmem:[%s207 + $0x8] sm:$0xff] %vm596, %v591
          %599 = vst.msk [vmem:[%s207 + $0x10] sm:$0xff] %vm596, %v593
          %600 = vst.msk [vmem:[%s207 + $0x18] sm:$0xff] %vm596, %v595
        $region44: #{tpu_custom_call.1} parent=31 // pred_fallthru
          _
        %p601 = scmp.lt.s32.totalorder %s21, 1
        %s602 = scalar_select %p601, %s21, 1
        %s603 = smul.addr %s602, 4
        %s604 = smul.addr %s603, 8
        %s605 = scalar_lea.vmem %s3, %s604
        // Predicated region
        $region45: #{tpu_custom_call.1} parent=31 // pred_check
          %p606 = pneg %p117
        $region46: #{tpu_custom_call.1} parent=31 // pred_check_branch
          %608 = sbr.rel (%p606) target = $region48
        $region47: #{tpu_custom_call.1} parent=31 // pred_region
          _
        $region48: #{tpu_custom_call.1} parent=31 // pred_fallthru
          _
      $region32: #{tpu_custom_call.1} parent=5 // pred_fallthru
        _
      %p609 = scmp.le.s32.totalorder 2, %s12
      // Predicated region
      $region49: #{tpu_custom_call.1} parent=5 // pred_check
        %p610 = pneg %p609
      $region50: #{tpu_custom_call.1} parent=5 // pred_check_branch
        %612 = sbr.rel (%p610) target = $region52
      $region51: #{tpu_custom_call.1} parent=5 // pred_region
        %s613 = ssub.s32 %s12, 2
        // Predicated region
        $region53: #{tpu_custom_call.1} parent=51 // pred_check
          %p614 = pneg %p123
        $region54: #{tpu_custom_call.1} parent=51 // pred_check_branch
          %616 = sbr.rel (%p614) target = $region56
        $region55: #{tpu_custom_call.1} parent=51 // pred_region
          %p617 = scmp.lt.s32.totalorder %s23, 1
          %s618 = scalar_select %p617, %s23, 1
          %s619 = smul.addr %s618, 4
          %s620 = smul.addr %s619, 8
          %s621 = scalar_lea.vmem %s3, %s620
        $region56: #{tpu_custom_call.1} parent=51 // pred_fallthru
          _
      $region52: #{tpu_custom_call.1} parent=5 // pred_fallthru
        _
    $region6: #{tpu_custom_call.1} parent=1 // loop_footer
      %s16 = sadd.s32 1, %s12
    $region7: #{tpu_custom_call.1} parent=1 // loop_footer_branch
      %11 = sbr.rel target = $region3
    $region8: #{tpu_custom_call.1} parent=1 // loop_exit
      _
    %622 = vsyncpa [#allocation5], 1
    %s623 = scalar_lea.sflag [#allocation5], 1
    %624 = vsyncpa %s623, 1

</llo_original>
